<compile_context>
chip_gen: v5e
topology: v5e:2x2
jax: 0.10.0
libtpu: 0.0.40
codegen_flags: <defaults>
</compile_context>

<pallas_src>
import jax
import jax.numpy as jnp
from jax.experimental import pallas as pl
from jax.experimental.pallas import tpu as pltpu


def _round_up(x, m):
    return ((x + m - 1) // m) * m


def _make_kernel_ones_col(deg_col):
    """In-degree carried through the aggregation matmul via a ones column of the
    padded h_s at column `deg_col` (fits inside existing lane padding)."""

    def kernel(adj_ref, hs_ref, hd_ref, w_self_ref, w_neigh_ref, b_ref,
               out_ref, acc_ref):
        k = pl.program_id(1)

        @pl.when(k == 0)
        def _init():
            acc_ref[...] = jnp.zeros_like(acc_ref)
            # Hoisted self path: the output block is resident across k, so the
            # self matmul + bias overlap aggregation DMAs instead of stacking
            # onto the last-k epilogue.
            out_ref[...] = (
                jnp.dot(hd_ref[...], w_self_ref[...],
                        preferred_element_type=jnp.float32)
                + b_ref[...]).astype(out_ref.dtype)

        # Native bf16 MXU pass; f32 accumulation in VMEM scratch.
        acc_ref[...] += jnp.dot(adj_ref[...], hs_ref[...],
                                preferred_element_type=jnp.float32)

        @pl.when(k == pl.num_programs(1) - 1)
        def _finalize():
            acc = acc_ref[...]
            deg = acc[:, deg_col:deg_col + 1]            # static lane slice
            inv = pl.reciprocal(jnp.maximum(deg, 1.0))   # exact; EUP, not VALU
            h_neigh = acc * inv                          # isolated dst -> 0
            out_ref[...] += jnp.dot(h_neigh, w_neigh_ref[...],
                                    preferred_element_type=jnp.float32
                                    ).astype(out_ref.dtype)

    return kernel


def _kernel_rowsum(adj_ref, hs_ref, hd_ref, w_self_ref, w_neigh_ref, b_ref,
                   out_ref, acc_ref, deg_ref):
    """Used when in_feat is already a multiple of 128: a ones column would blow
    f_pad up by a full lane group, so the in-degree is accumulated with a cheap
    per-step XLU row-sum of the adjacency tile instead."""
    k = pl.program_id(1)

    @pl.when(k == 0)
    def _init():
        acc_ref[...] = jnp.zeros_like(acc_ref)
        deg_ref[...] = jnp.zeros_like(deg_ref)
        out_ref[...] = (
            jnp.dot(hd_ref[...], w_self_ref[...],
                    preferred_element_type=jnp.float32)
            + b_ref[...]).astype(out_ref.dtype)

    acc_ref[...] += jnp.dot(adj_ref[...], hs_ref[...],
                            preferred_element_type=jnp.float32)
    # {0,1} adj: lane reduce with f32 accumulation (bf16 sums are inexact > 256).
    deg_ref[...] += jnp.sum(adj_ref[...].astype(jnp.float32),
                            axis=-1, keepdims=True)

    @pl.when(k == pl.num_programs(1) - 1)
    def _finalize():
        inv = pl.reciprocal(jnp.maximum(deg_ref[...], 1.0))
        h_neigh = acc_ref[...] * inv
        out_ref[...] += jnp.dot(h_neigh, w_neigh_ref[...],
                                preferred_element_type=jnp.float32
                                ).astype(out_ref.dtype)


def sage_conv(adj, h_s, h_d, weight, bias, *, tm_max=512, ts_max=1024):
    """DGL SAGEConv forward.

    adj:    (n_dst, n_src) dense {0,1} adjacency of the block (A[d, s] = edge s->d).
            Pass pre-cast bf16 and tile-aligned to skip the wrapper pad/cast pass.
    h_s:    (n_src, in_feat) source-node features
    h_d:    (n_dst, in_feat) destination-node features
    weight: (out_feat, 2*in_feat)   nn.Linear weight
    bias:   (out_feat,)             nn.Linear bias
    """
    assert tm_max % 16 == 0, "tm must be a multiple of 16 (bf16 adj sublane packing)"
    assert ts_max % 128 == 0
    n_dst, n_src = adj.shape
    in_feat = h_s.shape[1]
    out_feat = weight.shape[0]
    assert h_d.shape == (n_dst, in_feat)
    assert weight.shape == (out_feat, 2 * in_feat)

    # Ones column only when it fits inside existing lane padding.
    use_ones_col = (in_feat % 128) != 0
    f_pad = _round_up(in_feat + (1 if use_ones_col else 0), 128)
    o_pad = _round_up(out_feat, 128)

    tm = min(tm_max, _round_up(n_dst, 16))
    # Keep >= 2 dst tiles on big graphs so the "parallel" dst axis can feed both
    # TensorCores of a v7x megacore.
    if n_dst >= 256 and _round_up(n_dst, tm) // tm < 2:
        tm = _round_up((n_dst + 1) // 2, 16)
    ts = min(ts_max, _round_up(n_src, 128))
    n_dst_p = _round_up(n_dst, tm)
    n_src_p = _round_up(n_src, ts)

    # adj values are {0,1}: bf16 is exact and halves the dominant HBM stream.
    # Skip the extra HBM pass if the caller already provides bf16 / aligned adj.
    adj_p = adj if adj.dtype == jnp.bfloat16 else adj.astype(jnp.bfloat16)
    if adj_p.shape != (n_dst_p, n_src_p):
        adj_p = jnp.pad(adj_p, ((0, n_dst_p - n_dst), (0, n_src_p - n_src)))

    # h_s rides the MXU's native bf16 path (f32 accumulation inside the kernel).
    hs_p = jnp.pad(h_s.astype(jnp.bfloat16),
                   ((0, n_src_p - n_src), (0, f_pad - in_feat)))
    if use_ones_col:
        hs_p = hs_p.at[:, in_feat].set(1.0)       # ones column -> in-degree
    # h_d / weights / bias stay f32: they only feed the small finalize matmuls.
    hd_p = jnp.pad(h_d.astype(jnp.float32),
                   ((0, n_dst_p - n_dst), (0, f_pad - in_feat)))

    w = weight.astype(jnp.float32)
    w_self_p = jnp.pad(w[:, :in_feat].T,
                       ((0, f_pad - in_feat), (0, o_pad - out_feat)))
    w_neigh_p = jnp.pad(w[:, in_feat:].T,
                        ((0, f_pad - in_feat), (0, o_pad - out_feat)))
    b_p = jnp.pad(bias.astype(jnp.float32), (0, o_pad - out_feat)).reshape(1, o_pad)

    if use_ones_col:
        kernel = _make_kernel_ones_col(in_feat)
        scratch = [pltpu.VMEM((tm, f_pad), jnp.float32)]
    else:
        kernel = _kernel_rowsum
        scratch = [pltpu.VMEM((tm, f_pad), jnp.float32),
                   pltpu.VMEM((tm, 1), jnp.float32)]

    grid = (n_dst_p // tm, n_src_p // ts)

    # TODO(synk): training-mode Dropout(p=0.8) not applied (eval-mode identity);
    #             LayerNorm is never used in the module's forward and is omitted.
    out_p = pl.pallas_call(
        kernel,
        out_shape=jax.ShapeDtypeStruct((n_dst_p, o_pad), jnp.float32),
        grid=grid,
        in_specs=[
            pl.BlockSpec((tm, ts), lambda i, k: (i, k)),        # adj tile (bf16)
            pl.BlockSpec((ts, f_pad), lambda i, k: (k, 0)),     # h_s tile (bf16)
            pl.BlockSpec((tm, f_pad), lambda i, k: (i, 0)),     # h_d tile (f32)
            pl.BlockSpec((f_pad, o_pad), lambda i, k: (0, 0)),  # W_self (resident)
            pl.BlockSpec((f_pad, o_pad), lambda i, k: (0, 0)),  # W_neigh (resident)
            pl.BlockSpec((1, o_pad), lambda i, k: (0, 0)),      # bias
        ],
        out_specs=pl.BlockSpec((tm, o_pad), lambda i, k: (i, 0)),
        scratch_shapes=scratch,
        compiler_params=pltpu.CompilerParams(
            dimension_semantics=("parallel", "arbitrary"),
            vmem_limit_bytes=48 * 1024 * 1024,   # safe on v5e/v6e (128 MiB) and v7x (64 MiB)
        ),
    )(adj_p, hs_p, hd_p, w_self_p, w_neigh_p, b_p)

    return out_p[:n_dst, :out_feat]


def _reference(adj, h_s, h_d, weight, bias):
    deg = jnp.maximum(jnp.sum(adj, axis=1, keepdims=True), 1.0)
    h_neigh = (adj @ h_s) / deg
    return jnp.concatenate([h_d, h_neigh], axis=1) @ weight.T + bias


def _make_inputs(key, n_dst, n_src, in_feat, out_feat, density):
    k_adj, k_hs, k_hd, k_w, k_b = jax.random.split(key, 5)
    adj = (jax.random.uniform(k_adj, (n_dst, n_src)) < density).astype(jnp.float32)
    adj = adj.at[:, 0].set(1.0)                 # ensure >= 1 in-neighbor per dst
    h_s = jax.random.normal(k_hs, (n_src, in_feat), dtype=jnp.float32)
    h_d = jax.random.normal(k_hd, (n_dst, in_feat), dtype=jnp.float32)
    bound = 1.0 / jnp.sqrt(2.0 * in_feat)
    weight = jax.random.uniform(k_w, (out_feat, 2 * in_feat),
                                minval=-bound, maxval=bound, dtype=jnp.float32)
    bias = jax.random.uniform(k_b, (out_feat,),
                              minval=-bound, maxval=bound, dtype=jnp.float32)
    return adj, h_s, h_d, weight, bias


if __name__ == "__main__":
    key = jax.random.PRNGKey(0)
    k1, k2, k3 = jax.random.split(key, 3)
    # Tolerance accounts for the deliberate bf16 aggregation path (h_s carries
    # ~2^-9 relative rounding) vs the f32 reference; well within budget.
    TOL = dict(atol=1e-2, rtol=1e-2)

    # 1) Small single-tile case (toy shapes implied by the module) — ones-column
    #    degree path.
    adj, h_s, h_d, weight, bias = _make_inputs(
        k1, n_dst=8, n_src=16, in_feat=8, out_feat=16, density=0.3)
    out = sage_conv(adj, h_s, h_d, weight, bias)
    jax.block_until_ready(out)
    ref = _reference(adj, h_s, h_d, weight, bias)
    assert out.shape == ref.shape
    assert jnp.allclose(out, ref, **TOL), "small-case mismatch"

    # 2) Multi-tile case: exercises the (parallel dst, arbitrary src) grid,
    #    accumulator init / hoisted self path / finalize and ragged padding.
    adj2, h_s2, h_d2, weight2, bias2 = _make_inputs(
        k2, n_dst=272, n_src=300, in_feat=24, out_feat=40, density=0.1)
    out2 = sage_conv(adj2, h_s2, h_d2, weight2, bias2, tm_max=128, ts_max=128)
    jax.block_until_ready(out2)
    ref2 = _reference(adj2, h_s2, h_d2, weight2, bias2)
    assert out2.shape == ref2.shape
    assert jnp.allclose(out2, ref2, **TOL), "multi-tile mismatch"

    # 3) Lane-aligned feature width (in_feat % 128 == 0): exercises the row-sum
    #    degree path (no ones column, f_pad stays at in_feat).
    adj3, h_s3, h_d3, weight3, bias3 = _make_inputs(
        k3, n_dst=64, n_src=192, in_feat=128, out_feat=64, density=0.2)
    out3 = sage_conv(adj3, h_s3, h_d3, weight3, bias3, tm_max=64, ts_max=128)
    jax.block_until_ready(out3)
    ref3 = _reference(adj3, h_s3, h_d3, weight3, bias3)
    assert out3.shape == ref3.shape
    assert jnp.allclose(out3, ref3, **TOL), "lane-aligned (rowsum degree) mismatch"

    print("KERNEL_OK")
</pallas_src>

<mosaic_0001>
module attributes {stable_mosaic.version = 11 : i64} {
  func.func @kernel(%arg0: i32, %arg1: i32, %arg2: memref<16x128xbf16, #tpu.memory_space<vmem>>, %arg3: memref<128x128xbf16, #tpu.memory_space<vmem>>, %arg4: memref<16x128xf32, #tpu.memory_space<vmem>>, %arg5: memref<128x128xf32, #tpu.memory_space<vmem>>, %arg6: memref<128x128xf32, #tpu.memory_space<vmem>>, %arg7: memref<1x128xf32, #tpu.memory_space<vmem>>, %arg8: memref<16x128xf32, #tpu.memory_space<vmem>>, %arg9: memref<16x128xf32, #tpu.memory_space<vmem>>) attributes {dimension_semantics = [#tpu.dimension_semantics<parallel>, #tpu.dimension_semantics<arbitrary>], iteration_bounds = array<i64: 1, 1>, scalar_prefetch = 0 : i64, scratch_operands = 1 : i64, tpu.core_type = #tpu.core_type<tc>, window_params = [{transform_indices = @transform_0, window_bounds = array<i64: 16, 128>}, {transform_indices = @transform_1, window_bounds = array<i64: 128, 128>}, {transform_indices = @transform_2, window_bounds = array<i64: 16, 128>}, {pipeline_mode = #tpu.pipeline_mode<synchronous>, transform_indices = @transform_3, window_bounds = array<i64: 128, 128>}, {pipeline_mode = #tpu.pipeline_mode<synchronous>, transform_indices = @transform_4, window_bounds = array<i64: 128, 128>}, {pipeline_mode = #tpu.pipeline_mode<synchronous>, transform_indices = @transform_5, window_bounds = array<i64: 1, 128>}, {transform_indices = @transform_6, window_bounds = array<i64: 16, 128>}]} {
    %c0_i32 = arith.constant 0 : i32
    %0 = arith.cmpi eq, %arg1, %c0_i32 : i32
    %1 = arith.extui %0 : i1 to i32
    %c0_i32_0 = arith.constant 0 : i32
    %2 = arith.cmpi ne, %1, %c0_i32_0 : i32
    scf.if %2 {
      %cst_10 = arith.constant 0.000000e+00 : f32
      %12 = vector.broadcast %cst_10 : f32 to vector<16x128xf32>
      %c0_11 = arith.constant 0 : index
      %c0_12 = arith.constant 0 : index
      %13 = vector.load %arg9[%c0_11, %c0_12] : memref<16x128xf32, #tpu.memory_space<vmem>>, vector<16x128xf32>
      tpu.vector_store %arg9[%c0_11, %c0_12], %12 {strides = array<i32>} : memref<16x128xf32, #tpu.memory_space<vmem>>, vector<16x128xf32>,
      %c0_13 = arith.constant 0 : index
      %c0_14 = arith.constant 0 : index
      %14 = vector.load %arg4[%c0_13, %c0_14] : memref<16x128xf32, #tpu.memory_space<vmem>>, vector<16x128xf32>
      %c0_15 = arith.constant 0 : index
      %c0_16 = arith.constant 0 : index
      %15 = vector.load %arg5[%c0_15, %c0_16] : memref<128x128xf32, #tpu.memory_space<vmem>>, vector<128x128xf32>
      %cst_17 = arith.constant dense<0.000000e+00> : vector<16x128xf32>
      %16 = tpu.matmul %14, %15, %cst_17 {dimension_numbers = #tpu.dot_dimension_numbers<[1], [0], [0], [1], [0, 0, 1, 1], [], []>} : vector<16x128xf32>, vector<128x128xf32>, vector<16x128xf32> -> vector<16x128xf32>
      %c0_18 = arith.constant 0 : index
      %c0_19 = arith.constant 0 : index
      %17 = vector.load %arg7[%c0_18, %c0_19] : memref<1x128xf32, #tpu.memory_space<vmem>>, vector<1x128xf32>
      %18 = vector.broadcast %17 : vector<1x128xf32> to vector<16x128xf32>
      %19 = arith.addf %16, %18 : vector<16x128xf32>
      %c0_20 = arith.constant 0 : index
      %c0_21 = arith.constant 0 : index
      %20 = vector.load %arg8[%c0_20, %c0_21] : memref<16x128xf32, #tpu.memory_space<vmem>>, vector<16x128xf32>
      tpu.vector_store %arg8[%c0_20, %c0_21], %19 {strides = array<i32>} : memref<16x128xf32, #tpu.memory_space<vmem>>, vector<16x128xf32>,
    } else {
    }
    %c0 = arith.constant 0 : index
    %c0_1 = arith.constant 0 : index
    %3 = vector.load %arg9[%c0, %c0_1] : memref<16x128xf32, #tpu.memory_space<vmem>>, vector<16x128xf32>
    %c0_2 = arith.constant 0 : index
    %c0_3 = arith.constant 0 : index
    %4 = vector.load %arg2[%c0_2, %c0_3] : memref<16x128xbf16, #tpu.memory_space<vmem>>, vector<16x128xbf16>
    %c0_4 = arith.constant 0 : index
    %c0_5 = arith.constant 0 : index
    %5 = vector.load %arg3[%c0_4, %c0_5] : memref<128x128xbf16, #tpu.memory_space<vmem>>, vector<128x128xbf16>
    %cst = arith.constant dense<0.000000e+00> : vector<16x128xf32>
    %6 = tpu.matmul %4, %5, %cst {dimension_numbers = #tpu.dot_dimension_numbers<[1], [0], [0], [1], [0, 0, 1, 1], [], []>} : vector<16x128xbf16>, vector<128x128xbf16>, vector<16x128xf32> -> vector<16x128xf32>
    %7 = arith.addf %3, %6 : vector<16x128xf32>
    %c0_6 = arith.constant 0 : index
    %c0_7 = arith.constant 0 : index
    %8 = vector.load %arg9[%c0_6, %c0_7] : memref<16x128xf32, #tpu.memory_space<vmem>>, vector<16x128xf32>
    tpu.vector_store %arg9[%c0_6, %c0_7], %7 {strides = array<i32>} : memref<16x128xf32, #tpu.memory_space<vmem>>, vector<16x128xf32>,
    %c0_i32_8 = arith.constant 0 : i32
    %9 = arith.cmpi eq, %arg1, %c0_i32_8 : i32
    %10 = arith.extui %9 : i1 to i32
    %c0_i32_9 = arith.constant 0 : i32
    %11 = arith.cmpi ne, %10, %c0_i32_9 : i32
    scf.if %11 {
      %c0_10 = arith.constant 0 : index
      %c0_11 = arith.constant 0 : index
      %12 = vector.load %arg9[%c0_10, %c0_11] : memref<16x128xf32, #tpu.memory_space<vmem>>, vector<16x128xf32>
      %13 = vector.extract_strided_slice %12 {offsets = [0, 8], sizes = [16, 1], strides = [1, 1]} : vector<16x128xf32> to vector<16x1xf32>
      %cst_12 = arith.constant 1.000000e+00 : f32
      %14 = vector.broadcast %cst_12 : f32 to vector<16x1xf32>
      %15 = arith.maximumf %13, %14 : vector<16x1xf32>
      %16 = tpu.reciprocal %15 : vector<16x1xf32> -> vector<16x1xf32>
      %17 = vector.broadcast %16 : vector<16x1xf32> to vector<16x128xf32>
      %18 = arith.mulf %12, %17 : vector<16x128xf32>
      %c0_13 = arith.constant 0 : index
      %c0_14 = arith.constant 0 : index
      %19 = vector.load %arg8[%c0_13, %c0_14] : memref<16x128xf32, #tpu.memory_space<vmem>>, vector<16x128xf32>
      %c0_15 = arith.constant 0 : index
      %c0_16 = arith.constant 0 : index
      %20 = vector.load %arg6[%c0_15, %c0_16] : memref<128x128xf32, #tpu.memory_space<vmem>>, vector<128x128xf32>
      %cst_17 = arith.constant dense<0.000000e+00> : vector<16x128xf32>
      %21 = tpu.matmul %18, %20, %cst_17 {dimension_numbers = #tpu.dot_dimension_numbers<[1], [0], [0], [1], [0, 0, 1, 1], [], []>} : vector<16x128xf32>, vector<128x128xf32>, vector<16x128xf32> -> vector<16x128xf32>
      %22 = arith.addf %19, %21 : vector<16x128xf32>
      %c0_18 = arith.constant 0 : index
      %c0_19 = arith.constant 0 : index
      %23 = vector.load %arg8[%c0_18, %c0_19] : memref<16x128xf32, #tpu.memory_space<vmem>>, vector<16x128xf32>
      tpu.vector_store %arg8[%c0_18, %c0_19], %22 {strides = array<i32>} : memref<16x128xf32, #tpu.memory_space<vmem>>, vector<16x128xf32>,
    } else {
    }
    return
  }
  func.func @transform_0(%arg0: i32, %arg1: i32) -> (i32, i32) {
    %c0_i32 = arith.constant 0 : i32
    return %arg0, %arg1 : i32, i32
  }
  func.func @transform_1(%arg0: i32, %arg1: i32) -> (i32, i32) {
    %c0_i32 = arith.constant 0 : i32
    %c0_i32_0 = arith.constant 0 : i32
    return %arg1, %c0_i32 : i32, i32
  }
  func.func @transform_2(%arg0: i32, %arg1: i32) -> (i32, i32) {
    %c0_i32 = arith.constant 0 : i32
    %c0_i32_0 = arith.constant 0 : i32
    return %arg0, %c0_i32 : i32, i32
  }
  func.func @transform_3(%arg0: i32, %arg1: i32) -> (i32, i32) {
    %c0_i32 = arith.constant 0 : i32
    %c0_i32_0 = arith.constant 0 : i32
    %c0_i32_1 = arith.constant 0 : i32
    return %c0_i32, %c0_i32_0 : i32, i32
  }
  func.func @transform_4(%arg0: i32, %arg1: i32) -> (i32, i32) {
    %c0_i32 = arith.constant 0 : i32
    %c0_i32_0 = arith.constant 0 : i32
    %c0_i32_1 = arith.constant 0 : i32
    return %c0_i32, %c0_i32_0 : i32, i32
  }
  func.func @transform_5(%arg0: i32, %arg1: i32) -> (i32, i32) {
    %c0_i32 = arith.constant 0 : i32
    %c0_i32_0 = arith.constant 0 : i32
    %c0_i32_1 = arith.constant 0 : i32
    return %c0_i32, %c0_i32_0 : i32, i32
  }
  func.func @transform_6(%arg0: i32, %arg1: i32) -> (i32, i32) {
    %c0_i32 = arith.constant 0 : i32
    %c0_i32_0 = arith.constant 0 : i32
    return %arg0, %c0_i32 : i32, i32
  }
}

</mosaic_0001>

<llo_original>
// kernel: tpu_custom_call.1
$region0: #{tpu_custom_call.1}
  #allocation0 [shape = 'u32[]', space=smem, size = 0x4, offset = 0x4, fixed_abs, tag = 'smem constant byte address 0x4 - core index']
  #allocation1 [shape = 'u32[72,128]{1,0:T(1,128)}', space=vmem, size = 0x9000, scoped, tag = 'internal scratch']
  #allocation2 [shape = 'f32[16,128]{1,0:T(8,128)}', space=vmem, size = 0x2000, scoped, tag = 'scratch operand']
  %s0 = inlined_call_operand.hbm [shape: bf16[16,128], index: 0, kind: input, shape index: {}]
  %s1 = inlined_call_operand.hbm [shape: bf16[128,128], index: 1, kind: input, shape index: {}]
  %s2 = inlined_call_operand.hbm [shape: f32[16,128], index: 2, kind: input, shape index: {}]
  %s3 = inlined_call_operand.hbm [shape: f32[128,128], index: 3, kind: input, shape index: {}]
  %s4 = inlined_call_operand.hbm [shape: f32[128,128], index: 4, kind: input, shape index: {}]
  %s5 = inlined_call_operand.vmem [shape: f32[1,128], index: 5, kind: input, shape index: {}]
  %s6 = inlined_call_operand.hbm [shape: f32[16,128], index: 6, kind: output, shape index: {}]
  %s7 = sld [smem:[#allocation0]]
  $region62: #{tpu_custom_call.1} parent=0
    _
  %s9 = ssub.s32 1, %s7
  %s10 = scalar_select 0, %s9, %s7
  $region1: #{tpu_custom_call.1} parent=0
    #allocation3 [shape = 'u8[4096]{0}', space=vmem, size = 0x1000, scoped, tag = 'input window, operand 0, single buffered']
    #allocation4 [shape = 's32[1]{0}', space=sflag, size = 0x4, scoped, tag = 'scoped memory for tpu_custom_call.1']
    #allocation5 [shape = 's32[1]{0}', space=sflag, size = 0x4, scoped, tag = 'scoped memory for tpu_custom_call.1']
    #allocation6 [shape = 'u8[32768]{0}', space=vmem, size = 0x8000, scoped, tag = 'input window, operand 1, single buffered']
    #allocation7 [shape = 's32[1]{0}', space=sflag, size = 0x4, scoped, tag = 'scoped memory for tpu_custom_call.1']
    #allocation8 [shape = 'u8[8192]{0}', space=vmem, size = 0x2000, scoped, tag = 'input window, operand 2, single buffered']
    #allocation9 [shape = 'u8[65536]{0}', space=vmem, size = 0x10000, scoped, tag = 'input window, operand 3, single buffered']
    #allocation10 [shape = 's32[1]{0}', space=sflag, size = 0x4, scoped, tag = 'scoped memory for tpu_custom_call.1']
    #allocation11 [shape = 'u8[65536]{0}', space=vmem, size = 0x10000, scoped, tag = 'input window, operand 4, single buffered']
    #allocation12 [shape = 'u8[8192]{0}', space=vmem, size = 0x2000, scoped, tag = 'output window, operand 0, single buffered']
    %11 = vsyncpa [#allocation4], 0
    %12 = vsyncpa [#allocation7], 0
    %13 = vsyncpa [#allocation10], 0
    %14 = vsyncpa [#allocation5], 0
    // Predicated region
    $region2: #{tpu_custom_call.1} parent=1 // pred_check
      _
    $region3: #{tpu_custom_call.1} parent=1 // pred_check_branch
      %16 = sbr.rel (0) target = $region5
    $region4: #{tpu_custom_call.1} parent=1 // pred_region
      %18 = vsyncadd [#allocation4], 0
      %s19 = sshll.u32 %s0, 4
      %s20 = int_to_ptr.hbm [resolvable:$true] %s19
      %s21 = sshll.u32 [#allocation3], 4
      %s22 = int_to_ptr.vmem [resolvable:$true] %s21
      %27 = dma.hbm_to_vmem [thread:$0]  %s20, 128, %s22, [#allocation4], 64, 64, 4
    $region5: #{tpu_custom_call.1} parent=1 // pred_fallthru
      _
    // Predicated region
    $region6: #{tpu_custom_call.1} parent=1 // pred_check
      _
    $region7: #{tpu_custom_call.1} parent=1 // pred_check_branch
      %29 = sbr.rel (0) target = $region9
    $region8: #{tpu_custom_call.1} parent=1 // pred_region
      %31 = vsyncadd [#allocation7], 0
      %s32 = sshll.u32 %s1, 4
      %s33 = int_to_ptr.hbm [resolvable:$true] %s32
      %s34 = sshll.u32 [#allocation6], 4
      %s35 = int_to_ptr.vmem [resolvable:$true] %s34
      %40 = dma.hbm_to_vmem [thread:$0]  %s33, 1024, %s35, [#allocation7], 64, 64, 4
    $region9: #{tpu_custom_call.1} parent=1 // pred_fallthru
      _
    // Predicated region
    $region10: #{tpu_custom_call.1} parent=1 // pred_check
      _
    $region11: #{tpu_custom_call.1} parent=1 // pred_check_branch
      %42 = sbr.rel (0) target = $region13
    $region12: #{tpu_custom_call.1} parent=1 // pred_region
      %44 = vsyncadd [#allocation7], 0
      %s45 = sshll.u32 %s2, 4
      %s46 = int_to_ptr.hbm [resolvable:$true] %s45
      %s47 = sshll.u32 [#allocation8], 4
      %s48 = int_to_ptr.vmem [resolvable:$true] %s47
      %53 = dma.hbm_to_vmem [thread:$0]  %s46, 256, %s48, [#allocation7], 128, 128, 8
    $region13: #{tpu_custom_call.1} parent=1 // pred_fallthru
      _
    // Predicated region
    $region14: #{tpu_custom_call.1} parent=1 // pred_check
      _
    $region15: #{tpu_custom_call.1} parent=1 // pred_check_branch
      %55 = sbr.rel (0) target = $region17
    $region16: #{tpu_custom_call.1} parent=1 // pred_region
      %57 = vsyncadd [#allocation10], 0
      %s58 = sshll.u32 %s3, 4
      %s59 = int_to_ptr.hbm [resolvable:$true] %s58
      %s60 = sshll.u32 [#allocation9], 4
      %s61 = int_to_ptr.vmem [resolvable:$true] %s60
      %66 = dma.hbm_to_vmem [thread:$0]  %s59, 2048, %s61, [#allocation10], 128, 128, 8
    $region17: #{tpu_custom_call.1} parent=1 // pred_fallthru
      _
    // Predicated region
    $region18: #{tpu_custom_call.1} parent=1 // pred_check
      _
    $region19: #{tpu_custom_call.1} parent=1 // pred_check_branch
      %68 = sbr.rel (0) target = $region21
    $region20: #{tpu_custom_call.1} parent=1 // pred_region
      %70 = vsyncadd [#allocation10], 0
      %s71 = sshll.u32 %s4, 4
      %s72 = int_to_ptr.hbm [resolvable:$true] %s71
      %s73 = sshll.u32 [#allocation11], 4
      %s74 = int_to_ptr.vmem [resolvable:$true] %s73
      %79 = dma.hbm_to_vmem [thread:$0]  %s72, 2048, %s74, [#allocation10], 128, 128, 8
    $region21: #{tpu_custom_call.1} parent=1 // pred_fallthru
      _
    // Predicated region
    $region22: #{tpu_custom_call.1} parent=1 // pred_check
      _
    $region23: #{tpu_custom_call.1} parent=1 // pred_check_branch
      %81 = sbr.rel (0) target = $region25
    $region24: #{tpu_custom_call.1} parent=1 // pred_region
      _
    $region25: #{tpu_custom_call.1} parent=1 // pred_fallthru
      _
    // Predicated region
    $region26: #{tpu_custom_call.1} parent=1 // pred_check
      _
    $region27: #{tpu_custom_call.1} parent=1 // pred_check_branch
      %83 = sbr.rel (0) target = $region29
    $region28: #{tpu_custom_call.1} parent=1 // pred_region
      %85 = dma.done [#allocation4], 128
    $region29: #{tpu_custom_call.1} parent=1 // pred_fallthru
      _
    // Predicated region
    $region30: #{tpu_custom_call.1} parent=1 // pred_check
      _
    $region31: #{tpu_custom_call.1} parent=1 // pred_check_branch
      %87 = sbr.rel (0) target = $region33
    $region32: #{tpu_custom_call.1} parent=1 // pred_region
      %89 = dma.done [#allocation7], 1024
    $region33: #{tpu_custom_call.1} parent=1 // pred_fallthru
      _
    // Predicated region
    $region34: #{tpu_custom_call.1} parent=1 // pred_check
      _
    $region35: #{tpu_custom_call.1} parent=1 // pred_check_branch
      %91 = sbr.rel (0) target = $region37
    $region36: #{tpu_custom_call.1} parent=1 // pred_region
      %93 = dma.done [#allocation7], 256
    $region37: #{tpu_custom_call.1} parent=1 // pred_fallthru
      _
    // Predicated region
    $region38: #{tpu_custom_call.1} parent=1 // pred_check
      _
    $region39: #{tpu_custom_call.1} parent=1 // pred_check_branch
      %95 = sbr.rel (0) target = $region41
    $region40: #{tpu_custom_call.1} parent=1 // pred_region
      %97 = dma.done [#allocation10], 2048
    $region41: #{tpu_custom_call.1} parent=1 // pred_fallthru
      _
    // Predicated region
    $region42: #{tpu_custom_call.1} parent=1 // pred_check
      _
    $region43: #{tpu_custom_call.1} parent=1 // pred_check_branch
      %99 = sbr.rel (0) target = $region45
    $region44: #{tpu_custom_call.1} parent=1 // pred_region
      %101 = dma.done [#allocation10], 2048
    $region45: #{tpu_custom_call.1} parent=1 // pred_fallthru
      _
    %p102 = scmp.eq.s32.totalorder 0, 0
    // Predicated region
    $region46: #{tpu_custom_call.1} parent=1 // pred_check
      %p103 = pneg %p102
    $region47: #{tpu_custom_call.1} parent=1 // pred_check_branch
      %105 = sbr.rel (%p103) target = $region49
    $region48: #{tpu_custom_call.1} parent=1 // pred_region
      %106 = vst [vmem:[#allocation2] sm:$0xff] 0.0
      %107 = vst [vmem:[#allocation2 + $0x8] sm:$0xff] 0.0
      %v108 = vld [vmem:[#allocation8] sm:$0xff]
      %v109 = vld [vmem:[#allocation8 + $0x8] sm:$0xff]
      %v110 = vld [vmem:[#allocation9] sm:$0xff]
      %v111 = vld [vmem:[#allocation9 + $0x8] sm:$0xff]
      %v112 = vld [vmem:[#allocation9 + $0x10] sm:$0xff]
      %v113 = vld [vmem:[#allocation9 + $0x18] sm:$0xff]
      %v114 = vld [vmem:[#allocation9 + $0x20] sm:$0xff]
      %v115 = vld [vmem:[#allocation9 + $0x28] sm:$0xff]
      %v116 = vld [vmem:[#allocation9 + $0x30] sm:$0xff]
      %v117 = vld [vmem:[#allocation9 + $0x38] sm:$0xff]
      %v118 = vld [vmem:[#allocation9 + $0x40] sm:$0xff]
      %v119 = vld [vmem:[#allocation9 + $0x48] sm:$0xff]
      %v120 = vld [vmem:[#allocation9 + $0x50] sm:$0xff]
      %v121 = vld [vmem:[#allocation9 + $0x58] sm:$0xff]
      %v122 = vld [vmem:[#allocation9 + $0x60] sm:$0xff]
      %v123 = vld [vmem:[#allocation9 + $0x68] sm:$0xff]
      %v124 = vld [vmem:[#allocation9 + $0x70] sm:$0xff]
      %v125 = vld [vmem:[#allocation9 + $0x78] sm:$0xff]
      %v126 = vld [vmem:[%s5] sm:$0x1]
      %v128 = vperm.slane %v126, 0
      %130 = vmatpush.msra.mxu0 %v125
      %131 = vmatpush.msra.mxu0 %v124
      %132 = vmatpush.msra.mxu0 %v123
      %133 = vmatpush.msra.mxu0 %v122
      %134 = vmatpush.msra.mxu0 %v121
      %135 = vmatpush.msra.mxu0 %v120
      %136 = vmatpush.msra.mxu0 %v119
      %137 = vmatpush.msra.mxu0 %v118
      %138 = vmatpush.msra.mxu0 %v117
      %139 = vmatpush.msra.mxu0 %v116
      %140 = vmatpush.msra.mxu0 %v115
      %141 = vmatpush.msra.mxu0 %v114
      %142 = vmatpush.msra.mxu0 %v113
      %143 = vmatpush.msra.mxu0 %v112
      %144 = vmatpush.msra.mxu0 %v111
      %145 = vmatpush.msra.mxu0 %v110
      %146 = vmatmul.f32.gmra.mxu0 %v108
      %v147 = vpop.f32.mrf.mxu0
      %v148 = vadd.f32 %v128, %v147
      %149 = vmatmul.f32.gmra.mxu0 %v109
      %v150 = vpop.f32.mrf.mxu0
      %v151 = vadd.f32 %v128, %v150
      %152 = vdwg.mxu0
      %153 = vst [vmem:[#allocation12] sm:$0xff] %v148
      %154 = vst [vmem:[#allocation12 + $0x8] sm:$0xff] %v151
    $region49: #{tpu_custom_call.1} parent=1 // pred_fallthru
      _
    %v155 = vld [vmem:[#allocation2] sm:$0xff]
    %v156 = vld [vmem:[#allocation2 + $0x8] sm:$0xff]
    %v157 = vld [vmem:[#allocation3] sm:$0xf]
    %v158 = vld [vmem:[#allocation3 + $0x4] sm:$0xf]
    %v159 = vld [vmem:[#allocation6] sm:$0xf]
    %v160 = vld [vmem:[#allocation6 + $0x4] sm:$0xf]
    %v161 = vld [vmem:[#allocation6 + $0x8] sm:$0xf]
    %v162 = vld [vmem:[#allocation6 + $0xc] sm:$0xf]
    %v163 = vld [vmem:[#allocation6 + $0x10] sm:$0xf]
    %v164 = vld [vmem:[#allocation6 + $0x14] sm:$0xf]
    %v165 = vld [vmem:[#allocation6 + $0x18] sm:$0xf]
    %v166 = vld [vmem:[#allocation6 + $0x1c] sm:$0xf]
    %v167 = vld [vmem:[#allocation6 + $0x20] sm:$0xf]
    %v168 = vld [vmem:[#allocation6 + $0x24] sm:$0xf]
    %v169 = vld [vmem:[#allocation6 + $0x28] sm:$0xf]
    %v170 = vld [vmem:[#allocation6 + $0x2c] sm:$0xf]
    %v171 = vld [vmem:[#allocation6 + $0x30] sm:$0xf]
    %v172 = vld [vmem:[#allocation6 + $0x34] sm:$0xf]
    %v173 = vld [vmem:[#allocation6 + $0x38] sm:$0xf]
    %v174 = vld [vmem:[#allocation6 + $0x3c] sm:$0xf]
    %v177 = vunpack.c.l.b16 %v157
    %v178 = vunpack.c.l.b16 %v158
    %v179 = vpack.c.b16 %v178, %v177
    %v197 = vunpack.c.l.b16 %v159
    %v198 = vunpack.c.l.b16 %v160
    %v199 = vunpack.c.l.b16 %v161
    %v200 = vunpack.c.l.b16 %v162
    %v201 = vunpack.c.l.b16 %v163
    %v202 = vunpack.c.l.b16 %v164
    %v203 = vunpack.c.l.b16 %v165
    %v204 = vunpack.c.l.b16 %v166
    %v205 = vunpack.c.l.b16 %v167
    %v206 = vunpack.c.l.b16 %v168
    %v207 = vunpack.c.l.b16 %v169
    %v208 = vunpack.c.l.b16 %v170
    %v209 = vunpack.c.l.b16 %v171
    %v210 = vunpack.c.l.b16 %v172
    %v211 = vunpack.c.l.b16 %v173
    %v212 = vunpack.c.l.b16 %v174
    %v213 = vpack.c.b16 %v198, %v197
    %v214 = vpack.c.b16 %v200, %v199
    %v215 = vpack.c.b16 %v202, %v201
    %v216 = vpack.c.b16 %v204, %v203
    %v217 = vpack.c.b16 %v206, %v205
    %v218 = vpack.c.b16 %v208, %v207
    %v219 = vpack.c.b16 %v210, %v209
    %v220 = vpack.c.b16 %v212, %v211
    %229 = vmatpush.bf16.msra.mxu0 %v220
    %230 = vmatpush.bf16.msra.mxu0 %v219
    %231 = vmatpush.bf16.msra.mxu0 %v218
    %232 = vmatpush.bf16.msra.mxu0 %v217
    %233 = vmatpush.bf16.msra.mxu0 %v216
    %234 = vmatpush.bf16.msra.mxu0 %v215
    %235 = vmatpush.bf16.msra.mxu0 %v214
    %236 = vmatpush.bf16.msra.mxu0 %v213
    %237 = vmatmul.bf16.gmra.mxu0 %v179
    %v238 = vpop.f32.mrf.mxu0
    %v239 = vadd.f32 0.0, %v238
    %v240 = vpop.f32.mrf.mxu0
    %v241 = vadd.f32 0.0, %v240
    %242 = vdwg.mxu0
    %v243 = vadd.f32 %v155, %v239
    %v244 = vadd.f32 %v156, %v241
    %245 = vst [vmem:[#allocation2] sm:$0xff] %v243
    %246 = vst [vmem:[#allocation2 + $0x8] sm:$0xff] %v244
    // Predicated region
    $region50: #{tpu_custom_call.1} parent=1 // pred_check
      %p247 = pneg %p102
    $region51: #{tpu_custom_call.1} parent=1 // pred_check_branch
      %249 = sbr.rel (%p247) target = $region53
    $region52: #{tpu_custom_call.1} parent=1 // pred_region
      %v250 = vld [vmem:[#allocation2] sm:$0xff]
      %v251 = vld [vmem:[#allocation2 + $0x8] sm:$0xff]
      %v252 = vmax.f32 %v250, 1.0
      %v253 = vmax.f32 %v251, 1.0
      %v254 = vrcp.pop %v252
      %v255 = vmul.f32 %v252, %v254
      %v256 = vsub.f32 1.0, %v255
      %v257 = vmul.f32 %v254, %v256
      %v258 = vadd.f32 %v254, %v257
      %vm259 = vweird.f32 %v252
      %vm260 = vweird.f32 %v254
      %vm261 = vmor %vm259, %vm260
      %v262 = vsel %vm261, %v254, %v258
      %v263 = vand.u32 2147483647, %v252
      %vm264 = vcmp.eq.f32.partialorder %v263, 8.507059e+37
      %v265 = vand.u32 %v252, 2147483648
      %v266 = vor.u32 1.1754944e-38, %v265
      %v267 = vsel %vm264, %v266, %v262
      %v268 = vrcp.pop %v253
      %v269 = vmul.f32 %v253, %v268
      %v270 = vsub.f32 1.0, %v269
      %v271 = vmul.f32 %v268, %v270
      %v272 = vadd.f32 %v268, %v271
      %vm273 = vweird.f32 %v253
      %vm274 = vweird.f32 %v268
      %vm275 = vmor %vm273, %vm274
      %v276 = vsel %vm275, %v268, %v272
      %v277 = vand.u32 2147483647, %v253
      %vm278 = vcmp.eq.f32.partialorder %v277, 8.507059e+37
      %v279 = vand.u32 %v253, 2147483648
      %v280 = vor.u32 1.1754944e-38, %v279
      %v281 = vsel %vm278, %v280, %v276
      %283 = vset.pattern.permute.xlu0 8
      %284 = vperm.xlu0 %283, %v267
      %v285 = vpop.permute.xlu0 %284
      %288 = vset.pattern.permute.xlu0 8
      %289 = vperm.xlu0 %288, %v281
      %v290 = vpop.permute.xlu0 %289
      %v292 = vmul.f32 %v250, %v285
      %v293 = vmul.f32 %v251, %v290
      %v294 = vld [vmem:[#allocation12] sm:$0xff]
      %v295 = vld [vmem:[#allocation12 + $0x8] sm:$0xff]
      %v296 = vld [vmem:[#allocation11] sm:$0xff]
      %v297 = vld [vmem:[#allocation11 + $0x8] sm:$0xff]
      %v298 = vld [vmem:[#allocation11 + $0x10] sm:$0xff]
      %v299 = vld [vmem:[#allocation11 + $0x18] sm:$0xff]
      %v300 = vld [vmem:[#allocation11 + $0x20] sm:$0xff]
      %v301 = vld [vmem:[#allocation11 + $0x28] sm:$0xff]
      %v302 = vld [vmem:[#allocation11 + $0x30] sm:$0xff]
      %v303 = vld [vmem:[#allocation11 + $0x38] sm:$0xff]
      %v304 = vld [vmem:[#allocation11 + $0x40] sm:$0xff]
      %v305 = vld [vmem:[#allocation11 + $0x48] sm:$0xff]
      %v306 = vld [vmem:[#allocation11 + $0x50] sm:$0xff]
      %v307 = vld [vmem:[#allocation11 + $0x58] sm:$0xff]
      %v308 = vld [vmem:[#allocation11 + $0x60] sm:$0xff]
      %v309 = vld [vmem:[#allocation11 + $0x68] sm:$0xff]
      %v310 = vld [vmem:[#allocation11 + $0x70] sm:$0xff]
      %v311 = vld [vmem:[#allocation11 + $0x78] sm:$0xff]
      %312 = vmatpush.msra.mxu0 %v311
      %313 = vmatpush.msra.mxu0 %v310
      %314 = vmatpush.msra.mxu0 %v309
      %315 = vmatpush.msra.mxu0 %v308
      %316 = vmatpush.msra.mxu0 %v307
      %317 = vmatpush.msra.mxu0 %v306
      %318 = vmatpush.msra.mxu0 %v305
      %319 = vmatpush.msra.mxu0 %v304
      %320 = vmatpush.msra.mxu0 %v303
      %321 = vmatpush.msra.mxu0 %v302
      %322 = vmatpush.msra.mxu0 %v301
      %323 = vmatpush.msra.mxu0 %v300
      %324 = vmatpush.msra.mxu0 %v299
      %325 = vmatpush.msra.mxu0 %v298
      %326 = vmatpush.msra.mxu0 %v297
      %327 = vmatpush.msra.mxu0 %v296
      %328 = vmatmul.f32.gmra.mxu0 %v292
      %v329 = vpop.f32.mrf.mxu0
      %v330 = vadd.f32 0.0, %v329
      %331 = vmatmul.f32.gmra.mxu0 %v293
      %v332 = vpop.f32.mrf.mxu0
      %v333 = vadd.f32 0.0, %v332
      %334 = vdwg.mxu0
      %v335 = vadd.f32 %v294, %v330
      %v336 = vadd.f32 %v295, %v333
      %337 = vst [vmem:[#allocation12] sm:$0xff] %v335
      %338 = vst [vmem:[#allocation12 + $0x8] sm:$0xff] %v336
    $region53: #{tpu_custom_call.1} parent=1 // pred_fallthru
      _
    // Predicated region
    $region54: #{tpu_custom_call.1} parent=1 // pred_check
      _
    $region55: #{tpu_custom_call.1} parent=1 // pred_check_branch
      %340 = sbr.rel (0) target = $region57
    $region56: #{tpu_custom_call.1} parent=1 // pred_region
      %342 = vsyncadd [#allocation5], 0
      %s343 = sshll.u32 [#allocation12], 4
      %s344 = int_to_ptr.vmem [resolvable:$true] %s343
      %s345 = sshll.u32 %s6, 4
      %s346 = int_to_ptr.hbm [resolvable:$true] %s345
      %351 = dma.vmem_to_hbm [thread:$0]  %s344, 256, %s346, [#allocation5], 128, 128, 8
    $region57: #{tpu_custom_call.1} parent=1 // pred_fallthru
      _
    // Predicated region
    $region58: #{tpu_custom_call.1} parent=1 // pred_check
      _
    $region59: #{tpu_custom_call.1} parent=1 // pred_check_branch
      %353 = sbr.rel (0) target = $region61
    $region60: #{tpu_custom_call.1} parent=1 // pred_region
      %355 = dma.done [#allocation5], 256
    $region61: #{tpu_custom_call.1} parent=1 // pred_fallthru
      _
    %356 = vsyncpa [#allocation4], 1
    %357 = vsyncpa [#allocation7], 1
    %358 = vsyncpa [#allocation10], 1
    %359 = vsyncpa [#allocation5], 1

</llo_original>
